<compile_context>
chip_gen: v7x
topology: tpu7x:2x2x1
jax: 0.10.0
libtpu: 0.0.40
codegen_flags: <defaults>
</compile_context>

<pallas_src>
import functools

import jax
import jax.numpy as jnp
from jax.experimental import pallas as pl
from jax.experimental.pallas import tpu as pltpu


# ------------------------------ hardware query ------------------------------

def _vmem_capacity_bytes():
    """Per-core VMEM capacity; conservative 64 MiB fallback (v7x per-TC)."""
    try:
        info = pltpu.get_tpu_info()
        v = getattr(info, "vmem_capacity_bytes", None)
        if isinstance(v, int) and v > 0:
            return v
    except Exception:
        pass
    return 64 * 1024 * 1024


def _num_tensorcores():
    """TensorCores per chip (2 on v7x); conservative fallback of 1."""
    try:
        info = pltpu.get_tpu_info()
    except Exception:
        return 1
    for name in ("num_cores", "core_count", "num_tensorcores",
                 "tensorcore_count", "cores_per_chip"):
        v = getattr(info, name, None)
        if isinstance(v, int) and v > 0:
            return min(v, 2)
    return 1


# --------------------------------- kernel -----------------------------------

def _soft_ce_kernel(x_ref, t_ref, lp_ref, out_ref, *,
                    row_tile, n_rows, tiles_per_shard):
    """Accumulates per-class partial loss sums into the lane-dense output."""
    s = pl.program_id(0)           # shard (TensorCore) axis
    i = pl.program_id(1)           # reduction axis over row tiles

    @pl.when(i == 0)
    def _():
        out_ref[...] = jnp.zeros_like(out_ref)

    x = x_ref[...].astype(jnp.float32)     # (row_tile, C)
    t = t_ref[...].astype(jnp.float32)     # (row_tile, C)
    lp = lp_ref[...].astype(jnp.float32)   # (1, C) -- log(prob_list)

    # log-domain: logprobs = z - lse  =>  -t * logprobs = t * (lse - z)
    z = x + lp
    m = jnp.max(z, axis=-1, keepdims=True)
    lse = m + jnp.log(jnp.sum(jnp.exp(z - m), axis=-1, keepdims=True))
    contrib = t * (lse - z)                                  # (row_tile, C)

    # Mask tail rows of a partial last tile (no wrapper padding): rows >= N
    # contribute exactly 0, even if the out-of-bounds data is garbage/NaN.
    row_start = (s * tiles_per_shard + i) * row_tile
    rows = row_start + jax.lax.broadcasted_iota(jnp.int32, (row_tile, 1), 0)
    contrib = jnp.where(rows < n_rows, contrib, 0.0)

    # Lane-dense per-class accumulation; output block is resident across i.
    out_ref[...] += jnp.sum(contrib, axis=0, keepdims=True)  # (1, C)


# -------------------------------- wrapper ------------------------------------

def _round_up(v, m):
    return ((v + m - 1) // m) * m


def _choose_row_tile(n_rows, n_classes, in_itemsize, vmem_budget):
    # Per-step working set:
    #   2 inputs x 2 pipeline buffers (input dtype) + ~3 f32 intermediates
    #   (z, exp(z-m), contrib) of the same (row_tile, C) shape.
    per_row_bytes = n_classes * (2 * 2 * in_itemsize + 3 * 4)
    rt = max(8, vmem_budget // per_row_bytes)
    rt = min(rt, 16384)                       # keep per-step trip count sane
    rt = min(rt, _round_up(n_rows, 8))        # don't over-tile tiny batches
    return max(8, (rt // 8) * 8)


@functools.partial(
    jax.jit,
    static_argnames=("row_tile", "n_shards", "tiles_per_shard",
                     "n_rows", "vmem_limit"),
)
def _soft_ce_call(x, target, log_p2d, *, row_tile, n_shards, tiles_per_shard,
                  n_rows, vmem_limit):
    C = x.shape[1]
    kernel = functools.partial(
        _soft_ce_kernel,
        row_tile=row_tile, n_rows=n_rows, tiles_per_shard=tiles_per_shard,
    )
    dim_sem = (
        pltpu.CORE_PARALLEL if n_shards > 1 else pltpu.ARBITRARY,
        pltpu.ARBITRARY,
    )

    per_class = pl.pallas_call(
        kernel,
        out_shape=jax.ShapeDtypeStruct((n_shards, C), jnp.float32),
        grid_spec=pltpu.PrefetchScalarGridSpec(
            num_scalar_prefetch=0,
            grid=(n_shards, tiles_per_shard),
            in_specs=[
                pl.BlockSpec((row_tile, C),
                             lambda s, i: (s * tiles_per_shard + i, 0)),
                pl.BlockSpec((row_tile, C),
                             lambda s, i: (s * tiles_per_shard + i, 0)),
                pl.BlockSpec((1, C), lambda s, i: (0, 0)),  # shared log(prob)
            ],
            out_specs=pl.BlockSpec((1, C), lambda s, i: (s, 0)),
        ),
        compiler_params=pltpu.CompilerParams(
            dimension_semantics=dim_sem,
            vmem_limit_bytes=vmem_limit,
        ),
    )(x, target, log_p2d)

    # Final cross-lane reduce + mean in the wrapper (keeps the kernel's store
    # lane-dense and avoids an in-kernel epilogue full reduction).
    return (jnp.sum(per_class) / n_rows).astype(jnp.float32)


def soft_target_cross_entropy_lgadjusted(x, target, prob_list):
    """x: [N, C], target: [N, C], prob_list: [C] -> scalar mean loss."""
    N, C = x.shape
    assert target.shape == (N, C)
    assert prob_list.shape == (C,)

    # Generation-aware VMEM budgeting.
    vmem_cap = _vmem_capacity_bytes()
    vmem_limit = int(min(max(vmem_cap - (8 << 20), 32 << 20), 100 << 20))
    vmem_budget = min(vmem_limit // 2, 40 << 20)

    in_itemsize = max(x.dtype.itemsize, target.dtype.itemsize)
    row_tile = _choose_row_tile(N, C, in_itemsize, vmem_budget)

    n_tiles = pl.cdiv(N, row_tile)
    cores = _num_tensorcores()
    # Shard across TensorCores only when the tile count splits evenly (keeps
    # every block at least partially in-bounds) and there is real parallelism.
    n_shards = cores if (cores > 1 and n_tiles % cores == 0) else 1
    tiles_per_shard = n_tiles // n_shards

    # NOTE: zeros in prob_list give log(0) = -inf, the same hazard as the
    # PyTorch reference (log(y/sum) is also -inf there).
    log_p2d = jnp.log(prob_list.astype(jnp.float32)).reshape(1, C)

    return _soft_ce_call(
        x, target, log_p2d,
        row_tile=row_tile, n_shards=n_shards, tiles_per_shard=tiles_per_shard,
        n_rows=N, vmem_limit=vmem_limit,
    )


# ------------------------------- reference -----------------------------------

def _reference_jax(x, target, prob_list):
    y = jnp.exp(x.astype(jnp.float32)) * prob_list
    logprobs = jnp.log(y / jnp.sum(y, axis=-1, keepdims=True))
    return jnp.sum(-target * logprobs, axis=-1).mean()


if __name__ == "__main__":
    key = jax.random.PRNGKey(0)

    def make_case(k, n, c):
        k_x, k_t, k_p = jax.random.split(k, 3)
        xx = jax.random.normal(k_x, (n, c), dtype=jnp.float32)
        tt = jax.nn.softmax(jax.random.normal(k_t, (n, c), dtype=jnp.float32),
                            axis=-1)
        pp = jax.nn.softmax(jax.random.normal(k_p, (c,), dtype=jnp.float32))
        return xx, tt, pp

    k1, k2 = jax.random.split(key)

    # Case 1: the module's nominal small shape (batch=8 rows, 32 classes).
    x, t, p = make_case(k1, 8, 32)
    out = jax.block_until_ready(soft_target_cross_entropy_lgadjusted(x, t, p))
    ref = _reference_jax(x, t, p)
    assert jnp.allclose(out, ref, rtol=1e-5, atol=1e-5), (out, ref)

    # Case 2: exercises the in-kernel tail-row mask (N not a multiple of the
    # row tile) and a class count that is not a multiple of 128.
    x, t, p = make_case(k2, 13, 40)
    out = jax.block_until_ready(soft_target_cross_entropy_lgadjusted(x, t, p))
    ref = _reference_jax(x, t, p)
    assert jnp.allclose(out, ref, rtol=1e-5, atol=1e-5), (out, ref)

    print("KERNEL_OK")
</pallas_src>

<mosaic_0001>
module attributes {stable_mosaic.version = 11 : i64} {
  func.func @_soft_ce_kernel(%arg0: i32, %arg1: i32, %arg2: memref<8x32xf32, #tpu.memory_space<vmem>>, %arg3: memref<8x32xf32, #tpu.memory_space<vmem>>, %arg4: memref<1x32xf32, #tpu.memory_space<vmem>>, %arg5: memref<1x32xf32, #tpu.memory_space<vmem>>) attributes {dimension_semantics = [#tpu.dimension_semantics<arbitrary>, #tpu.dimension_semantics<arbitrary>], iteration_bounds = array<i64: 1, 1>, scalar_prefetch = 0 : i64, scratch_operands = 0 : i64, tpu.core_type = #tpu.core_type<tc>, window_params = [{transform_indices = @transform_0, window_bounds = array<i64: 8, 32>}, {transform_indices = @transform_1, window_bounds = array<i64: 8, 32>}, {pipeline_mode = #tpu.pipeline_mode<synchronous>, transform_indices = @transform_2, window_bounds = array<i64: 1, 32>}, {transform_indices = @transform_3, window_bounds = array<i64: 1, 32>}]} {
    %c0_i32 = arith.constant 0 : i32
    %0 = arith.cmpi eq, %arg1, %c0_i32 : i32
    %1 = arith.extui %0 : i1 to i32
    %c0_i32_0 = arith.constant 0 : i32
    %2 = arith.cmpi ne, %1, %c0_i32_0 : i32
    scf.if %2 {
      %cst_14 = arith.constant 0.000000e+00 : f32
      %37 = vector.broadcast %cst_14 : f32 to vector<1x32xf32>
      %c0_15 = arith.constant 0 : index
      %c0_16 = arith.constant 0 : index
      %38 = vector.load %arg5[%c0_15, %c0_16] : memref<1x32xf32, #tpu.memory_space<vmem>>, vector<1x32xf32>
      tpu.vector_store %arg5[%c0_15, %c0_16], %37 {strides = array<i32>} : memref<1x32xf32, #tpu.memory_space<vmem>>, vector<1x32xf32>,
    } else {
    }
    %c0 = arith.constant 0 : index
    %c0_1 = arith.constant 0 : index
    %3 = vector.load %arg2[%c0, %c0_1] : memref<8x32xf32, #tpu.memory_space<vmem>>, vector<8x32xf32>
    %c0_2 = arith.constant 0 : index
    %c0_3 = arith.constant 0 : index
    %4 = vector.load %arg3[%c0_2, %c0_3] : memref<8x32xf32, #tpu.memory_space<vmem>>, vector<8x32xf32>
    %c0_4 = arith.constant 0 : index
    %c0_5 = arith.constant 0 : index
    %5 = vector.load %arg4[%c0_4, %c0_5] : memref<1x32xf32, #tpu.memory_space<vmem>>, vector<1x32xf32>
    %6 = vector.broadcast %5 : vector<1x32xf32> to vector<8x32xf32>
    %7 = arith.addf %3, %6 : vector<8x32xf32>
    %cst = arith.constant dense<0xFF800000> : vector<8xf32>
    %8 = vector.multi_reduction <maximumf>, %7, %cst [1] : vector<8x32xf32> to vector<8xf32>
    %9 = vector.shape_cast %8 : vector<8xf32> to vector<8x1xf32>
    %10 = vector.broadcast %9 : vector<8x1xf32> to vector<8x32xf32>
    %11 = arith.subf %7, %10 : vector<8x32xf32>
    %12 = math.exp %11 : vector<8x32xf32>
    %cst_6 = arith.constant dense<0.000000e+00> : vector<8xf32>
    %13 = vector.multi_reduction <add>, %12, %cst_6 [1] : vector<8x32xf32> to vector<8xf32>
    %14 = vector.shape_cast %13 : vector<8xf32> to vector<8x1xf32>
    %15 = math.log %14 : vector<8x1xf32>
    %16 = arith.addf %9, %15 : vector<8x1xf32>
    %17 = vector.broadcast %16 : vector<8x1xf32> to vector<8x32xf32>
    %18 = arith.subf %17, %7 : vector<8x32xf32>
    %19 = arith.mulf %4, %18 : vector<8x32xf32>
    %c1_i32 = arith.constant 1 : i32
    %20 = arith.muli %arg0, %c1_i32 : i32
    %21 = arith.addi %20, %arg1 : i32
    %c8_i32 = arith.constant 8 : i32
    %22 = arith.muli %21, %c8_i32 : i32
    %23 = tpu.iota {dimensions = array<i32: 0>} : vector<8x1xi32>
    %24 = vector.broadcast %22 : i32 to vector<8x1xi32>
    %25 = arith.addi %24, %23 : vector<8x1xi32>
    %c8_i32_7 = arith.constant 8 : i32
    %26 = vector.broadcast %c8_i32_7 : i32 to vector<8x1xi32>
    %27 = arith.cmpi slt, %25, %26 : vector<8x1xi32>
    %cst_8 = arith.constant 0.000000e+00 : f32
    %28 = vector.shape_cast %27 : vector<8x1xi1> to vector<8x1xi1>
    %29 = vector.broadcast %28 : vector<8x1xi1> to vector<8x32xi1>
    %30 = vector.broadcast %cst_8 : f32 to vector<8x32xf32>
    %31 = arith.select %29, %19, %30 : vector<8x32xi1>, vector<8x32xf32>
    %c0_9 = arith.constant 0 : index
    %c0_10 = arith.constant 0 : index
    %32 = vector.load %arg5[%c0_9, %c0_10] : memref<1x32xf32, #tpu.memory_space<vmem>>, vector<1x32xf32>
    %cst_11 = arith.constant dense<0.000000e+00> : vector<32xf32>
    %33 = vector.multi_reduction <add>, %31, %cst_11 [0] : vector<8x32xf32> to vector<32xf32>
    %34 = vector.shape_cast %33 : vector<32xf32> to vector<1x32xf32>
    %35 = arith.addf %32, %34 : vector<1x32xf32>
    %c0_12 = arith.constant 0 : index
    %c0_13 = arith.constant 0 : index
    %36 = vector.load %arg5[%c0_12, %c0_13] : memref<1x32xf32, #tpu.memory_space<vmem>>, vector<1x32xf32>
    tpu.vector_store %arg5[%c0_12, %c0_13], %35 {strides = array<i32>} : memref<1x32xf32, #tpu.memory_space<vmem>>, vector<1x32xf32>,
    return
  }
  func.func @transform_0(%arg0: i32, %arg1: i32) -> (i32, i32) {
    %c1_i32 = arith.constant 1 : i32
    %0 = arith.muli %arg0, %c1_i32 : i32
    %1 = arith.addi %0, %arg1 : i32
    %c0_i32 = arith.constant 0 : i32
    %c0_i32_0 = arith.constant 0 : i32
    return %1, %c0_i32 : i32, i32
  }
  func.func @transform_1(%arg0: i32, %arg1: i32) -> (i32, i32) {
    %c1_i32 = arith.constant 1 : i32
    %0 = arith.muli %arg0, %c1_i32 : i32
    %1 = arith.addi %0, %arg1 : i32
    %c0_i32 = arith.constant 0 : i32
    %c0_i32_0 = arith.constant 0 : i32
    return %1, %c0_i32 : i32, i32
  }
  func.func @transform_2(%arg0: i32, %arg1: i32) -> (i32, i32) {
    %c0_i32 = arith.constant 0 : i32
    %c0_i32_0 = arith.constant 0 : i32
    %c0_i32_1 = arith.constant 0 : i32
    return %c0_i32, %c0_i32_0 : i32, i32
  }
  func.func @transform_3(%arg0: i32, %arg1: i32) -> (i32, i32) {
    %c0_i32 = arith.constant 0 : i32
    %c0_i32_0 = arith.constant 0 : i32
    return %arg0, %c0_i32 : i32, i32
  }
}

</mosaic_0001>

<llo_original>
// kernel: _soft_ce_call.1
$region0: #{_soft_ce_call.1}
  #allocation0 [shape = 'u32[]', space=smem, size = 0x4, offset = 0x4, fixed_abs, tag = 'smem constant byte address 0x4 - core index']
  #allocation1 [shape = 'u32[144,128]{1,0:T(1,128)}', space=vmem, size = 0x12000, scoped, tag = 'internal scratch']
  %s0 = inlined_call_operand.hbm [shape: f32[8,32], index: 0, kind: input, shape index: {}]
  %s1 = inlined_call_operand.hbm [shape: f32[8,32], index: 1, kind: input, shape index: {}]
  %s2 = inlined_call_operand.vmem [shape: f32[1,32], index: 2, kind: input, shape index: {}]
  %s3 = inlined_call_operand.vmem [shape: f32[1,32], index: 3, kind: output, shape index: {}]
  %s4 = sld [smem:[#allocation0]]
  $region34: #{_soft_ce_call.1} parent=0
    _
  %s6 = ssub.s32 1, %s4
  %s7 = scalar_select 0, %s6, %s4
  $region1: #{_soft_ce_call.1} parent=0
    #allocation2 [shape = 'u8[4096]{0}', space=vmem, size = 0x1000, scoped, tag = 'input window, operand 0, single buffered']
    #allocation3 [shape = 's32[1]{0}', space=sflag, size = 0x4, scoped, tag = 'scoped memory for _soft_ce_call.1']
    #allocation4 [shape = 'u8[4096]{0}', space=vmem, size = 0x1000, scoped, tag = 'input window, operand 1, single buffered']
    #allocation5 [shape = 's32[1]{0}', space=sflag, size = 0x4, scoped, tag = 'scoped memory for _soft_ce_call.1']
    %8 = vsyncpa [#allocation3], 0
    %9 = vsyncpa [#allocation5], 0
    // Predicated region
    $region2: #{_soft_ce_call.1} parent=1 // pred_check
      _
    $region3: #{_soft_ce_call.1} parent=1 // pred_check_branch
      %11 = sbr.rel (0) target = $region5
    $region4: #{_soft_ce_call.1} parent=1 // pred_region
      %s12 = sadd.s32 0, 0
      %s14 = ssub.s32 128, 128
      %15 = vsyncadd [#allocation3], %s14
      %s16 = smul.addr %s12, 128
      %s17 = scalar_lea.hbm %s0, %s16
      %s19 = sshll.u32 [#allocation2], 4
      %s20 = int_to_ptr.vmem [resolvable:$true] %s19
      %22 = dma.hbm_to_vmem [thread:$0]  %s17, 128, %s20, [#allocation3]
    $region5: #{_soft_ce_call.1} parent=1 // pred_fallthru
      _
    // Predicated region
    $region6: #{_soft_ce_call.1} parent=1 // pred_check
      _
    $region7: #{_soft_ce_call.1} parent=1 // pred_check_branch
      %24 = sbr.rel (0) target = $region9
    $region8: #{_soft_ce_call.1} parent=1 // pred_region
      %s25 = sadd.s32 0, 0
      %s27 = ssub.s32 128, 128
      %28 = vsyncadd [#allocation5], %s27
      %s29 = smul.addr %s25, 128
      %s30 = scalar_lea.hbm %s1, %s29
      %s32 = sshll.u32 [#allocation4], 4
      %s33 = int_to_ptr.vmem [resolvable:$true] %s32
      %35 = dma.hbm_to_vmem [thread:$0]  %s30, 128, %s33, [#allocation5]
    $region9: #{_soft_ce_call.1} parent=1 // pred_fallthru
      _
    // Predicated region
    $region10: #{_soft_ce_call.1} parent=1 // pred_check
      _
    $region11: #{_soft_ce_call.1} parent=1 // pred_check_branch
      %37 = sbr.rel (0) target = $region13
    $region12: #{_soft_ce_call.1} parent=1 // pred_region
      _
    $region13: #{_soft_ce_call.1} parent=1 // pred_fallthru
      _
    // Predicated region
    $region14: #{_soft_ce_call.1} parent=1 // pred_check
      _
    $region15: #{_soft_ce_call.1} parent=1 // pred_check_branch
      %39 = sbr.rel (0) target = $region17
    $region16: #{_soft_ce_call.1} parent=1 // pred_region
      %40 = dma.done [#allocation3], 128
    $region17: #{_soft_ce_call.1} parent=1 // pred_fallthru
      _
    // Predicated region
    $region18: #{_soft_ce_call.1} parent=1 // pred_check
      _
    $region19: #{_soft_ce_call.1} parent=1 // pred_check_branch
      %42 = sbr.rel (0) target = $region21
    $region20: #{_soft_ce_call.1} parent=1 // pred_region
      %43 = dma.done [#allocation5], 128
    $region21: #{_soft_ce_call.1} parent=1 // pred_fallthru
      _
    %s44 = sadd.s32 0, 0
    %s45 = sadd.s32 0, 0
    %p46 = scmp.eq.s32.totalorder 0, 0
    // Predicated region
    $region22: #{_soft_ce_call.1} parent=1 // pred_check
      %p47 = pneg %p46
    $region23: #{_soft_ce_call.1} parent=1 // pred_check_branch
      %49 = sbr.rel (%p47) target = $region25
    $region24: #{_soft_ce_call.1} parent=1 // pred_region
      %vm50 = vcmask 253952
      %51 = vst.msk [vmem:[%s3] sm:$0x1] %vm50, 0.0
    $region25: #{_soft_ce_call.1} parent=1 // pred_fallthru
      _
    %v52 = vld [vmem:[#allocation2] sm:$0xff]
    %v53 = vld [vmem:[#allocation4] sm:$0xff]
    %v54 = vld [vmem:[%s2] sm:$0x1]
    %v56 = vlaneseq
    %v57 = vshrl.u32 %v56, 7
    %v58 = vsub.s32 0, %v57
    %v59 = vrot.slane %v54, %v58
    %v61 = vadd.f32 %v52, %v59
    %vm62 = vcmask 261120
    %v63 = vsel %vm62, %v61, -inf
    %64 = vmax.xlane.f32.xlu0 %v63
    %v65 = vpop.xlane.xlu0 %64
    %v66 = vsub.f32 %v61, %v65
    %v67 = vmul.f32 %v66, 1.442695
    %v68 = vpow.pop %v67
    %v69 = vsel %vm62, %v68, 0.0
    %70 = vadd.xlane.f32.xlu0 %v69
    %v71 = vpop.xlane.xlu0 %70
    %v72 = vlog2.pop %v71
    %v73 = vmul.f32 %v72, 0.6931472
    %v74 = vadd.f32 %v65, %v73
    %v75 = vsub.f32 %v74, %v61
    %v76 = vmul.f32 %v53, %v75
    %s77 = sadd.s32 0, 0
    %s78 = smul.u32 %s77, 8
    %v79 = vlaneseq
    %v80 = vshrl.u32 %v79, 7
    %v81 = vstv %s78
    %v82 = vadd.s32 %v81, %v80
    %vm83 = vcmp.lt.s32.totalorder %v82, 8
    %v84 = vsel %vm83, 1, 0
    %vm85 = vcmp.eq.s32.totalorder %v84, 1
    %v86 = vsel %vm85, %v76, 0.0
    %v87 = vld [vmem:[%s3] sm:$0x1]
    %v88 = vsel %vm62, %v86, 0.0
    %v89 = vrot.slane %v88, 4
    %v90 = vadd.f32 %v88, %v89
    %v91 = vrot.slane %v90, 2
    %v92 = vadd.f32 %v90, %v91
    %v93 = vrot.slane %v92, 1
    %v94 = vadd.f32 %v92, %v93
    %v95 = vadd.f32 %v87, %v94
    %vm96 = vcmask 253952
    %97 = vst.msk [vmem:[%s3] sm:$0x1] %vm96, %v95
    // Predicated region
    $region26: #{_soft_ce_call.1} parent=1 // pred_check
      _
    $region27: #{_soft_ce_call.1} parent=1 // pred_check_branch
      %99 = sbr.rel (0) target = $region29
    $region28: #{_soft_ce_call.1} parent=1 // pred_region
      _
    $region29: #{_soft_ce_call.1} parent=1 // pred_fallthru
      _
    // Predicated region
    $region30: #{_soft_ce_call.1} parent=1 // pred_check
      _
    $region31: #{_soft_ce_call.1} parent=1 // pred_check_branch
      %101 = sbr.rel (0) target = $region33
    $region32: #{_soft_ce_call.1} parent=1 // pred_region
      _
    $region33: #{_soft_ce_call.1} parent=1 // pred_fallthru
      _
    %102 = vsyncpa [#allocation3], 1
    %103 = vsyncpa [#allocation5], 1

</llo_original>
